<compile_context>
chip_gen: v7x
topology: tpu7x:2x2x1
jax: 0.10.0
libtpu: 0.0.40
codegen_flags: <defaults>
</compile_context>

<pallas_src>
import functools

import jax
import jax.numpy as jnp
from jax.experimental import pallas as pl
from jax.experimental.pallas import tpu as pltpu

EPS = 1e-5


def _linear_bn_kernel(x_ref, w_ref, gb_ref, o_ref, *, act, inv_n):
    # x_ref:  (N, C_in)   full batch, resident across grid steps (constant index map)
    # w_ref:  (tn, C_in)  one tile of output channels of W (PyTorch layout)
    # gb_ref: (2, tn)     row 0 = gamma, row 1 = beta window for this channel tile
    # o_ref:  (N, tn)
    x = x_ref[...]
    w = w_ref[...]

    # Linear (no bias): y = x @ W^T as an NT contraction on the MXU (no wrapper
    # transpose). If a bundle dump ever shows a per-step vxpose of the weight
    # tile, store the parameter as (C_in, C_out) and contract (1,)(0,) instead.
    y = jax.lax.dot_general(
        x, w, (((1,), (1,)), ((), ())),
        preferred_element_type=jnp.float32,
    )  # (N, tn), f32

    # One-pass batch statistics over axis 0 on the XLU (sublane reduce); keeps
    # the MXU free for the matmul.
    s1 = jnp.sum(y, axis=0, keepdims=True)        # (1, tn)
    s2 = jnp.sum(y * y, axis=0, keepdims=True)    # (1, tn)
    mean = s1 * inv_n
    var = s2 * inv_n - mean * mean                # biased variance (BN training mode)

    gamma = gb_ref[0:1, :]                        # (1, tn)
    beta = gb_ref[1:2, :]                         # (1, tn)
    a = gamma * jax.lax.rsqrt(var + EPS)          # per-channel scale
    b = beta - mean * a                           # per-channel shift
    out = y * a + b                               # single fused VPU pass

    if act == "relu":
        out = jnp.maximum(out, 0.0)
    elif callable(act):
        out = act(out)
    # act is None by default (matches LinearBn(..., act=None))

    o_ref[...] = out.astype(o_ref.dtype)


def _is_dual_tensorcore():
    """True on chips with 2 TensorCores per device (v7x-class)."""
    try:
        kind = jax.devices()[0].device_kind.lower()
    except Exception:
        return False
    return ("v7" in kind) or ("7x" in kind)


def _pick_tn(n, c_in, c_out, itemsize, *, two_tc, budget=24 * 1024 * 1024):
    """Channel-tile width. Single grid step on 1-TC chips when it fits VMEM;
    256/128-wide tiles (>= 2 steps) when two TensorCores can share the grid."""

    def fits(tn):
        resident = n * c_in * itemsize + 2 * c_out * 4        # x + gb (upper bound)
        streamed = 2 * tn * c_in * itemsize                   # weight double-buffer
        out_buf = 2 * n * tn * 4                              # output double-buffer
        return resident + streamed + out_buf < budget

    if not two_tc and fits(c_out):
        return c_out                                          # grid = (1,)
    for tn in (256, 128):
        if c_out % tn == 0 and c_out // tn >= (2 if two_tc else 1) and fits(tn):
            return tn
    return c_out


def pack_bn_params(gamma, beta):
    """Stack BN affine params into one (2, C_out) array. Do this once per layer
    (outside the per-call path), not per forward."""
    return jnp.stack([gamma.astype(jnp.float32), beta.astype(jnp.float32)], axis=0)


def linear_bn(x, weight, gamma=None, beta=None, *, gb=None, act=None, tn=None,
              matmul_dtype=None, vmem_limit_bytes=None):
    """Forward of LinearBn.

    x:      (N, C_in) float32
    weight: (C_out, C_in)  -- PyTorch nn.Linear weight layout (no transpose needed)
    gamma/beta: (C_out,)   -- BN affine params, or pass gb=pack_bn_params(gamma, beta)
    act:    None | "relu" | callable
    matmul_dtype: e.g. jnp.bfloat16 -> cast in the wrapper (halves weight DMA);
                  matmul accumulates f32, BN stats stay f32.
    """
    N, C_in = x.shape
    C_out, C_in_w = weight.shape
    assert C_in_w == C_in, "weight must be (C_out, C_in)"

    out_dtype = x.dtype
    if gb is None:
        gb = pack_bn_params(gamma, beta)

    if matmul_dtype is not None:
        x = x.astype(matmul_dtype)
        weight = weight.astype(matmul_dtype)

    itemsize = jnp.dtype(x.dtype).itemsize
    two_tc = _is_dual_tensorcore()
    if tn is None:
        tn = _pick_tn(N, C_in, C_out, itemsize, two_tc=two_tc)
    assert C_out % tn == 0, "C_out must be a multiple of the channel tile"

    grid = (C_out // tn,)
    if vmem_limit_bytes is None:
        footprint = (N * C_in * itemsize          # resident x
                     + 2 * tn * C_in * itemsize   # weight double-buffer
                     + 2 * N * tn * 4             # output double-buffer
                     + 2 * 2 * tn * 4)            # gb double-buffer
        vmem_limit_bytes = int(min(max(2 * footprint, 16 * 1024 * 1024),
                                   48 * 1024 * 1024))

    kernel = functools.partial(_linear_bn_kernel, act=act, inv_n=1.0 / N)

    return pl.pallas_call(
        kernel,
        out_shape=jax.ShapeDtypeStruct((N, C_out), out_dtype),
        grid_spec=pltpu.PrefetchScalarGridSpec(
            num_scalar_prefetch=0,
            grid=grid,
            in_specs=[
                pl.BlockSpec((N, C_in), lambda j: (0, 0)),    # full x, resident
                pl.BlockSpec((tn, C_in), lambda j: (j, 0)),   # weight channel tile
                pl.BlockSpec((2, tn), lambda j: (0, j)),      # gamma/beta window
            ],
            out_specs=pl.BlockSpec((N, tn), lambda j: (0, j)),
        ),
        compiler_params=pltpu.CompilerParams(
            dimension_semantics=("parallel",) if grid[0] > 1 else ("arbitrary",),
            vmem_limit_bytes=vmem_limit_bytes,
        ),
    )(x, weight, gb)


def _reference(x, weight, gamma, beta, act=None):
    y = x @ weight.T
    mean = jnp.mean(y, axis=0, keepdims=True)
    var = jnp.mean((y - mean) ** 2, axis=0, keepdims=True)
    out = (y - mean) / jnp.sqrt(var + EPS) * gamma[None, :] + beta[None, :]
    if act == "relu":
        out = jnp.maximum(out, 0.0)
    return out


if __name__ == "__main__":
    key = jax.random.PRNGKey(0)
    k_x, k_w, k_g, k_b = jax.random.split(key, 4)

    # Small shapes consistent with the MPNN MLP layers.
    # v5e/v6e: tn=512 -> grid=(1,); v7x: tn=256 -> grid=(2,) across both TCs.
    N, C_IN, C_OUT = 64, 64, 512

    x = jax.random.normal(k_x, (N, C_IN), dtype=jnp.float32)

    # Kaiming-uniform-style bound like nn.Linear; non-trivial BN affine params
    # so the per-tile gamma/beta windowing is actually exercised.
    bound = 1.0 / jnp.sqrt(jnp.float32(C_IN))
    weight = jax.random.uniform(
        k_w, (C_OUT, C_IN), dtype=jnp.float32, minval=-bound, maxval=bound
    )
    gamma = 1.0 + 0.1 * jax.random.normal(k_g, (C_OUT,), dtype=jnp.float32)
    beta = 0.1 * jax.random.normal(k_b, (C_OUT,), dtype=jnp.float32)

    gb = pack_bn_params(gamma, beta)   # hoisted out of the per-call path

    out = linear_bn(x, weight, gb=gb, act=None)
    out = jax.block_until_ready(out)

    ref = _reference(x, weight, gamma, beta, act=None)
    assert out.shape == (N, C_OUT)
    assert jnp.allclose(out, ref, atol=2e-4, rtol=2e-4), "mismatch vs reference"

    print("KERNEL_OK")
</pallas_src>

<mosaic_0001>
module attributes {stable_mosaic.version = 11 : i64} {
  func.func @_linear_bn_kernel(%arg0: i32, %arg1: memref<64x64xf32, #tpu.memory_space<vmem>>, %arg2: memref<512x64xf32, #tpu.memory_space<vmem>>, %arg3: memref<2x512xf32, #tpu.memory_space<vmem>>, %arg4: memref<64x512xf32, #tpu.memory_space<vmem>>) attributes {dimension_semantics = [#tpu.dimension_semantics<arbitrary>], iteration_bounds = array<i64: 1>, scalar_prefetch = 0 : i64, scratch_operands = 0 : i64, tpu.core_type = #tpu.core_type<tc>, window_params = [{pipeline_mode = #tpu.pipeline_mode<synchronous>, transform_indices = @transform_0, window_bounds = array<i64: 64, 64>}, {transform_indices = @transform_1, window_bounds = array<i64: 512, 64>}, {transform_indices = @transform_2, window_bounds = array<i64: 2, 512>}, {transform_indices = @transform_3, window_bounds = array<i64: 64, 512>}]} {
    %c0 = arith.constant 0 : index
    %c0_0 = arith.constant 0 : index
    %0 = vector.load %arg1[%c0, %c0_0] : memref<64x64xf32, #tpu.memory_space<vmem>>, vector<64x64xf32>
    %c0_1 = arith.constant 0 : index
    %c0_2 = arith.constant 0 : index
    %1 = vector.load %arg2[%c0_1, %c0_2] : memref<512x64xf32, #tpu.memory_space<vmem>>, vector<512x64xf32>
    %cst = arith.constant dense<0.000000e+00> : vector<64x512xf32>
    %2 = tpu.matmul %0, %1, %cst {dimension_numbers = #tpu.dot_dimension_numbers<[1], [1], [0], [0], [0, 0, 1, 0], [], []>} : vector<64x64xf32>, vector<512x64xf32>, vector<64x512xf32> -> vector<64x512xf32>
    %cst_3 = arith.constant dense<0.000000e+00> : vector<512xf32>
    %3 = vector.multi_reduction <add>, %2, %cst_3 [0] : vector<64x512xf32> to vector<512xf32>
    %4 = vector.shape_cast %3 : vector<512xf32> to vector<1x512xf32>
    %5 = arith.mulf %2, %2 : vector<64x512xf32>
    %cst_4 = arith.constant dense<0.000000e+00> : vector<512xf32>
    %6 = vector.multi_reduction <add>, %5, %cst_4 [0] : vector<64x512xf32> to vector<512xf32>
    %7 = vector.shape_cast %6 : vector<512xf32> to vector<1x512xf32>
    %cst_5 = arith.constant 1.562500e-02 : f32
    %8 = vector.broadcast %cst_5 : f32 to vector<1x512xf32>
    %9 = arith.mulf %4, %8 : vector<1x512xf32>
    %cst_6 = arith.constant 1.562500e-02 : f32
    %10 = vector.broadcast %cst_6 : f32 to vector<1x512xf32>
    %11 = arith.mulf %7, %10 : vector<1x512xf32>
    %12 = arith.mulf %9, %9 : vector<1x512xf32>
    %13 = arith.subf %11, %12 : vector<1x512xf32>
    %c0_7 = arith.constant 0 : index
    %c0_8 = arith.constant 0 : index
    %14 = vector.load %arg3[%c0_7, %c0_8] : memref<2x512xf32, #tpu.memory_space<vmem>>, vector<1x512xf32>
    %c1 = arith.constant 1 : index
    %c0_9 = arith.constant 0 : index
    %15 = vector.load %arg3[%c1, %c0_9] : memref<2x512xf32, #tpu.memory_space<vmem>>, vector<1x512xf32>
    %cst_10 = arith.constant 9.99999974E-6 : f32
    %16 = vector.broadcast %cst_10 : f32 to vector<1x512xf32>
    %17 = arith.addf %13, %16 : vector<1x512xf32>
    %18 = math.rsqrt %17 : vector<1x512xf32>
    %19 = arith.mulf %14, %18 : vector<1x512xf32>
    %20 = arith.mulf %9, %19 : vector<1x512xf32>
    %21 = arith.subf %15, %20 : vector<1x512xf32>
    %22 = vector.broadcast %19 : vector<1x512xf32> to vector<64x512xf32>
    %23 = arith.mulf %2, %22 : vector<64x512xf32>
    %24 = vector.broadcast %21 : vector<1x512xf32> to vector<64x512xf32>
    %25 = arith.addf %23, %24 : vector<64x512xf32>
    %c0_11 = arith.constant 0 : index
    %c0_12 = arith.constant 0 : index
    %26 = vector.load %arg4[%c0_11, %c0_12] : memref<64x512xf32, #tpu.memory_space<vmem>>, vector<64x512xf32>
    tpu.vector_store %arg4[%c0_11, %c0_12], %25 {strides = array<i32>} : memref<64x512xf32, #tpu.memory_space<vmem>>, vector<64x512xf32>,
    return
  }
  func.func @transform_0(%arg0: i32) -> (i32, i32) {
    %c0_i32 = arith.constant 0 : i32
    %c0_i32_0 = arith.constant 0 : i32
    %c0_i32_1 = arith.constant 0 : i32
    return %c0_i32, %c0_i32_0 : i32, i32
  }
  func.func @transform_1(%arg0: i32) -> (i32, i32) {
    %c0_i32 = arith.constant 0 : i32
    %c0_i32_0 = arith.constant 0 : i32
    return %arg0, %c0_i32 : i32, i32
  }
  func.func @transform_2(%arg0: i32) -> (i32, i32) {
    %c0_i32 = arith.constant 0 : i32
    %c0_i32_0 = arith.constant 0 : i32
    return %c0_i32, %arg0 : i32, i32
  }
  func.func @transform_3(%arg0: i32) -> (i32, i32) {
    %c0_i32 = arith.constant 0 : i32
    %c0_i32_0 = arith.constant 0 : i32
    return %c0_i32, %arg0 : i32, i32
  }
}

</mosaic_0001>

<llo_original>
// kernel: tpu_custom_call.1
$region0: #{tpu_custom_call.1}
  #allocation0 [shape = 'u32[]', space=smem, size = 0x4, offset = 0x4, fixed_abs, tag = 'smem constant byte address 0x4 - core index']
  #allocation1 [shape = 'u32[144,128]{1,0:T(1,128)}', space=vmem, size = 0x12000, scoped, tag = 'internal scratch']
  %s0 = inlined_call_operand.vmem [shape: f32[64,64], index: 0, kind: input, shape index: {}]
  %s1 = inlined_call_operand.vmem [shape: f32[512,64], index: 1, kind: input, shape index: {}]
  %s2 = inlined_call_operand.vmem [shape: f32[2,512], index: 2, kind: input, shape index: {}]
  %s3 = inlined_call_operand.hbm [shape: f32[64,512], index: 3, kind: output, shape index: {}]
  %s4 = sld [smem:[#allocation0]]
  $region22: #{tpu_custom_call.1} parent=0
    _
  %s6 = ssub.s32 1, %s4
  %s7 = scalar_select 0, %s6, %s4
  $region1: #{tpu_custom_call.1} parent=0
    #allocation2 [shape = 'u8[131072]{0}', space=vmem, size = 0x20000, scoped, tag = 'output window, operand 0, single buffered']
    #allocation3 [shape = 's32[1]{0}', space=sflag, size = 0x4, scoped, tag = 'scoped memory for tpu_custom_call.1']
    %8 = vsyncpa [#allocation3], 0
    // Predicated region
    $region2: #{tpu_custom_call.1} parent=1 // pred_check
      _
    $region3: #{tpu_custom_call.1} parent=1 // pred_check_branch
      %10 = sbr.rel (0) target = $region5
    $region4: #{tpu_custom_call.1} parent=1 // pred_region
      _
    $region5: #{tpu_custom_call.1} parent=1 // pred_fallthru
      _
    // Predicated region
    $region6: #{tpu_custom_call.1} parent=1 // pred_check
      _
    $region7: #{tpu_custom_call.1} parent=1 // pred_check_branch
      %12 = sbr.rel (0) target = $region9
    $region8: #{tpu_custom_call.1} parent=1 // pred_region
      _
    $region9: #{tpu_custom_call.1} parent=1 // pred_fallthru
      _
    // Predicated region
    $region10: #{tpu_custom_call.1} parent=1 // pred_check
      _
    $region11: #{tpu_custom_call.1} parent=1 // pred_check_branch
      %14 = sbr.rel (0) target = $region13
    $region12: #{tpu_custom_call.1} parent=1 // pred_region
      _
    $region13: #{tpu_custom_call.1} parent=1 // pred_fallthru
      _
    %v15 = vld [vmem:[%s0] sm:$0xff]
    %v16 = vld [vmem:[%s0 + $0x8] sm:$0xff]
    %v17 = vld [vmem:[%s0 + $0x10] sm:$0xff]
    %v18 = vld [vmem:[%s0 + $0x18] sm:$0xff]
    %v19 = vld [vmem:[%s0 + $0x20] sm:$0xff]
    %v20 = vld [vmem:[%s0 + $0x28] sm:$0xff]
    %v21 = vld [vmem:[%s0 + $0x30] sm:$0xff]
    %v22 = vld [vmem:[%s0 + $0x38] sm:$0xff]
    %v23 = vld [vmem:[%s1] sm:$0xff]
    %v24 = vld [vmem:[%s1 + $0x8] sm:$0xff]
    %v25 = vld [vmem:[%s1 + $0x10] sm:$0xff]
    %v26 = vld [vmem:[%s1 + $0x18] sm:$0xff]
    %v27 = vld [vmem:[%s1 + $0x20] sm:$0xff]
    %v28 = vld [vmem:[%s1 + $0x28] sm:$0xff]
    %v29 = vld [vmem:[%s1 + $0x30] sm:$0xff]
    %v30 = vld [vmem:[%s1 + $0x38] sm:$0xff]
    %v31 = vld [vmem:[%s1 + $0x40] sm:$0xff]
    %v32 = vld [vmem:[%s1 + $0x48] sm:$0xff]
    %v33 = vld [vmem:[%s1 + $0x50] sm:$0xff]
    %v34 = vld [vmem:[%s1 + $0x58] sm:$0xff]
    %v35 = vld [vmem:[%s1 + $0x60] sm:$0xff]
    %v36 = vld [vmem:[%s1 + $0x68] sm:$0xff]
    %v37 = vld [vmem:[%s1 + $0x70] sm:$0xff]
    %v38 = vld [vmem:[%s1 + $0x78] sm:$0xff]
    %v39 = vld [vmem:[%s1 + $0x80] sm:$0xff]
    %v40 = vld [vmem:[%s1 + $0x88] sm:$0xff]
    %v41 = vld [vmem:[%s1 + $0x90] sm:$0xff]
    %v42 = vld [vmem:[%s1 + $0x98] sm:$0xff]
    %v43 = vld [vmem:[%s1 + $0xa0] sm:$0xff]
    %v44 = vld [vmem:[%s1 + $0xa8] sm:$0xff]
    %v45 = vld [vmem:[%s1 + $0xb0] sm:$0xff]
    %v46 = vld [vmem:[%s1 + $0xb8] sm:$0xff]
    %v47 = vld [vmem:[%s1 + $0xc0] sm:$0xff]
    %v48 = vld [vmem:[%s1 + $0xc8] sm:$0xff]
    %v49 = vld [vmem:[%s1 + $0xd0] sm:$0xff]
    %v50 = vld [vmem:[%s1 + $0xd8] sm:$0xff]
    %v51 = vld [vmem:[%s1 + $0xe0] sm:$0xff]
    %v52 = vld [vmem:[%s1 + $0xe8] sm:$0xff]
    %v53 = vld [vmem:[%s1 + $0xf0] sm:$0xff]
    %v54 = vld [vmem:[%s1 + $0xf8] sm:$0xff]
    %v55 = vld [vmem:[%s1 + $0x100] sm:$0xff]
    %v56 = vld [vmem:[%s1 + $0x108] sm:$0xff]
    %v57 = vld [vmem:[%s1 + $0x110] sm:$0xff]
    %v58 = vld [vmem:[%s1 + $0x118] sm:$0xff]
    %v59 = vld [vmem:[%s1 + $0x120] sm:$0xff]
    %v60 = vld [vmem:[%s1 + $0x128] sm:$0xff]
    %v61 = vld [vmem:[%s1 + $0x130] sm:$0xff]
    %v62 = vld [vmem:[%s1 + $0x138] sm:$0xff]
    %v63 = vld [vmem:[%s1 + $0x140] sm:$0xff]
    %v64 = vld [vmem:[%s1 + $0x148] sm:$0xff]
    %v65 = vld [vmem:[%s1 + $0x150] sm:$0xff]
    %v66 = vld [vmem:[%s1 + $0x158] sm:$0xff]
    %v67 = vld [vmem:[%s1 + $0x160] sm:$0xff]
    %v68 = vld [vmem:[%s1 + $0x168] sm:$0xff]
    %v69 = vld [vmem:[%s1 + $0x170] sm:$0xff]
    %v70 = vld [vmem:[%s1 + $0x178] sm:$0xff]
    %v71 = vld [vmem:[%s1 + $0x180] sm:$0xff]
    %v72 = vld [vmem:[%s1 + $0x188] sm:$0xff]
    %v73 = vld [vmem:[%s1 + $0x190] sm:$0xff]
    %v74 = vld [vmem:[%s1 + $0x198] sm:$0xff]
    %v75 = vld [vmem:[%s1 + $0x1a0] sm:$0xff]
    %v76 = vld [vmem:[%s1 + $0x1a8] sm:$0xff]
    %v77 = vld [vmem:[%s1 + $0x1b0] sm:$0xff]
    %v78 = vld [vmem:[%s1 + $0x1b8] sm:$0xff]
    %v79 = vld [vmem:[%s1 + $0x1c0] sm:$0xff]
    %v80 = vld [vmem:[%s1 + $0x1c8] sm:$0xff]
    %v81 = vld [vmem:[%s1 + $0x1d0] sm:$0xff]
    %v82 = vld [vmem:[%s1 + $0x1d8] sm:$0xff]
    %v83 = vld [vmem:[%s1 + $0x1e0] sm:$0xff]
    %v84 = vld [vmem:[%s1 + $0x1e8] sm:$0xff]
    %v85 = vld [vmem:[%s1 + $0x1f0] sm:$0xff]
    %v86 = vld [vmem:[%s1 + $0x1f8] sm:$0xff]
    %vm87 = vcmask 523264
    %v89 = vsel %vm87, %v15, 0
    %v92 = vsel %vm87, %v16, 0
    %v95 = vsel %vm87, %v17, 0
    %v98 = vsel %vm87, %v18, 0
    %v101 = vsel %vm87, %v19, 0
    %v104 = vsel %vm87, %v20, 0
    %v107 = vsel %vm87, %v21, 0
    %v110 = vsel %vm87, %v22, 0
    %v113 = vsel %vm87, %v23, 0
    %v116 = vsel %vm87, %v24, 0
    %v119 = vsel %vm87, %v25, 0
    %v122 = vsel %vm87, %v26, 0
    %v125 = vsel %vm87, %v27, 0
    %v128 = vsel %vm87, %v28, 0
    %v131 = vsel %vm87, %v29, 0
    %v134 = vsel %vm87, %v30, 0
    %v137 = vsel %vm87, %v31, 0
    %v140 = vsel %vm87, %v32, 0
    %v143 = vsel %vm87, %v33, 0
    %v146 = vsel %vm87, %v34, 0
    %v149 = vsel %vm87, %v35, 0
    %v152 = vsel %vm87, %v36, 0
    %v155 = vsel %vm87, %v37, 0
    %v158 = vsel %vm87, %v38, 0
    %v161 = vsel %vm87, %v39, 0
    %v164 = vsel %vm87, %v40, 0
    %v167 = vsel %vm87, %v41, 0
    %v170 = vsel %vm87, %v42, 0
    %v173 = vsel %vm87, %v43, 0
    %v176 = vsel %vm87, %v44, 0
    %v179 = vsel %vm87, %v45, 0
    %v182 = vsel %vm87, %v46, 0
    %v185 = vsel %vm87, %v47, 0
    %v188 = vsel %vm87, %v48, 0
    %v191 = vsel %vm87, %v49, 0
    %v194 = vsel %vm87, %v50, 0
    %v197 = vsel %vm87, %v51, 0
    %v200 = vsel %vm87, %v52, 0
    %v203 = vsel %vm87, %v53, 0
    %v206 = vsel %vm87, %v54, 0
    %v209 = vsel %vm87, %v55, 0
    %v212 = vsel %vm87, %v56, 0
    %v215 = vsel %vm87, %v57, 0
    %v218 = vsel %vm87, %v58, 0
    %v221 = vsel %vm87, %v59, 0
    %v224 = vsel %vm87, %v60, 0
    %v227 = vsel %vm87, %v61, 0
    %v230 = vsel %vm87, %v62, 0
    %v233 = vsel %vm87, %v63, 0
    %v236 = vsel %vm87, %v64, 0
    %v239 = vsel %vm87, %v65, 0
    %v242 = vsel %vm87, %v66, 0
    %v245 = vsel %vm87, %v67, 0
    %v248 = vsel %vm87, %v68, 0
    %v251 = vsel %vm87, %v69, 0
    %v254 = vsel %vm87, %v70, 0
    %v257 = vsel %vm87, %v71, 0
    %v260 = vsel %vm87, %v72, 0
    %v263 = vsel %vm87, %v73, 0
    %v266 = vsel %vm87, %v74, 0
    %v269 = vsel %vm87, %v75, 0
    %v272 = vsel %vm87, %v76, 0
    %v275 = vsel %vm87, %v77, 0
    %v278 = vsel %vm87, %v78, 0
    %v281 = vsel %vm87, %v79, 0
    %v284 = vsel %vm87, %v80, 0
    %v287 = vsel %vm87, %v81, 0
    %v290 = vsel %vm87, %v82, 0
    %v293 = vsel %vm87, %v83, 0
    %v296 = vsel %vm87, %v84, 0
    %v299 = vsel %vm87, %v85, 0
    %v302 = vsel %vm87, %v86, 0
    %304 = vmatprep.subr.mxu0 0.0
    %305 = vmatpush1.xpose.msra.mxu0 %v113
    %306 = vmatprep.subr.mxu0 0.0
    %307 = vmatpush1.xpose.msra.mxu0 %v116
    %308 = vmatprep.subr.mxu0 0.0
    %309 = vmatpush1.xpose.msra.mxu0 %v119
    %310 = vmatprep.subr.mxu0 0.0
    %311 = vmatpush1.xpose.msra.mxu0 %v122
    %312 = vmatprep.subr.mxu0 0.0
    %313 = vmatpush1.xpose.msra.mxu0 %v125
    %314 = vmatprep.subr.mxu0 0.0
    %315 = vmatpush1.xpose.msra.mxu0 %v128
    %316 = vmatprep.subr.mxu0 0.0
    %317 = vmatpush1.xpose.msra.mxu0 %v131
    %318 = vmatprep.subr.mxu0 0.0
    %319 = vmatpush1.xpose.msra.mxu0 %v134
    %320 = vmatprep.subr.mxu0 0.0
    %321 = vmatpush1.xpose.msra.mxu0 %v137
    %322 = vmatprep.subr.mxu0 0.0
    %323 = vmatpush1.xpose.msra.mxu0 %v140
    %324 = vmatprep.subr.mxu0 0.0
    %325 = vmatpush1.xpose.msra.mxu0 %v143
    %326 = vmatprep.subr.mxu0 0.0
    %327 = vmatpush1.xpose.msra.mxu0 %v146
    %328 = vmatprep.subr.mxu0 0.0
    %329 = vmatpush1.xpose.msra.mxu0 %v149
    %330 = vmatprep.subr.mxu0 0.0
    %331 = vmatpush1.xpose.msra.mxu0 %v152
    %332 = vmatprep.subr.mxu0 0.0
    %333 = vmatpush1.xpose.msra.mxu0 %v155
    %334 = vmatprep.subr.mxu0 0.0
    %335 = vmatpush1.xpose.msra.mxu0 %v158
    %336 = vmatprep.subr.mxu0 0.0
    %337 = vmatpush1.xpose.msra.mxu0 %v161
    %338 = vmatprep.subr.mxu0 0.0
    %339 = vmatpush1.xpose.msra.mxu0 %v164
    %340 = vmatprep.subr.mxu0 0.0
    %341 = vmatpush1.xpose.msra.mxu0 %v167
    %342 = vmatprep.subr.mxu0 0.0
    %343 = vmatpush1.xpose.msra.mxu0 %v170
    %344 = vmatprep.subr.mxu0 0.0
    %345 = vmatpush1.xpose.msra.mxu0 %v173
    %346 = vmatprep.subr.mxu0 0.0
    %347 = vmatpush1.xpose.msra.mxu0 %v176
    %348 = vmatprep.subr.mxu0 0.0
    %349 = vmatpush1.xpose.msra.mxu0 %v179
    %350 = vmatprep.subr.mxu0 0.0
    %351 = vmatpush1.xpose.msra.mxu0 %v182
    %352 = vmatprep.subr.mxu0 0.0
    %353 = vmatpush1.xpose.msra.mxu0 %v185
    %354 = vmatprep.subr.mxu0 0.0
    %355 = vmatpush1.xpose.msra.mxu0 %v188
    %356 = vmatprep.subr.mxu0 0.0
    %357 = vmatpush1.xpose.msra.mxu0 %v191
    %358 = vmatprep.subr.mxu0 0.0
    %359 = vmatpush1.xpose.msra.mxu0 %v194
    %360 = vmatprep.subr.mxu0 0.0
    %361 = vmatpush1.xpose.msra.mxu0 %v197
    %362 = vmatprep.subr.mxu0 0.0
    %363 = vmatpush1.xpose.msra.mxu0 %v200
    %364 = vmatprep.subr.mxu0 0.0
    %365 = vmatpush1.xpose.msra.mxu0 %v203
    %366 = vmatprep.subr.mxu0 0.0
    %367 = vmatpush1.xpose.msra.mxu0 %v206
    %368 = vmatprep.mubr.f32.mxu0 0.0
    %369 = vmatmul.mubr.f32.gmra.mrb[0].mxu0 %v89
    %v370 = vpop.f32.mrb[0].mxu0
    %v371 = vadd.f32 0.0, %v370
    %v372 = vpop.f32.mrb[0].mxu0
    %v373 = vadd.f32 0.0, %v372
    %374 = vmatprep.mubr.f32.mxu0 0.0
    %375 = vmatmul.mubr.f32.gmra.mrb[0].mxu0 %v92
    %v376 = vpop.f32.mrb[0].mxu0
    %v377 = vadd.f32 0.0, %v376
    %v378 = vpop.f32.mrb[0].mxu0
    %v379 = vadd.f32 0.0, %v378
    %380 = vmatprep.mubr.f32.mxu0 0.0
    %381 = vmatmul.mubr.f32.gmra.mrb[0].mxu0 %v95
    %v382 = vpop.f32.mrb[0].mxu0
    %v383 = vadd.f32 0.0, %v382
    %v384 = vpop.f32.mrb[0].mxu0
    %v385 = vadd.f32 0.0, %v384
    %386 = vmatprep.mubr.f32.mxu0 0.0
    %387 = vmatmul.mubr.f32.gmra.mrb[0].mxu0 %v98
    %v388 = vpop.f32.mrb[0].mxu0
    %v389 = vadd.f32 0.0, %v388
    %v390 = vpop.f32.mrb[0].mxu0
    %v391 = vadd.f32 0.0, %v390
    %392 = vmatprep.mubr.f32.mxu0 0.0
    %393 = vmatmul.mubr.f32.gmra.mrb[0].mxu0 %v101
    %v394 = vpop.f32.mrb[0].mxu0
    %v395 = vadd.f32 0.0, %v394
    %v396 = vpop.f32.mrb[0].mxu0
    %v397 = vadd.f32 0.0, %v396
    %398 = vmatprep.mubr.f32.mxu0 0.0
    %399 = vmatmul.mubr.f32.gmra.mrb[0].mxu0 %v104
    %v400 = vpop.f32.mrb[0].mxu0
    %v401 = vadd.f32 0.0, %v400
    %v402 = vpop.f32.mrb[0].mxu0
    %v403 = vadd.f32 0.0, %v402
    %404 = vmatprep.mubr.f32.mxu0 0.0
    %405 = vmatmul.mubr.f32.gmra.mrb[0].mxu0 %v107
    %v406 = vpop.f32.mrb[0].mxu0
    %v407 = vadd.f32 0.0, %v406
    %v408 = vpop.f32.mrb[0].mxu0
    %v409 = vadd.f32 0.0, %v408
    %410 = vmatprep.mubr.f32.mxu0 0.0
    %411 = vmatmul.mubr.f32.gmra.mrb[0].mxu0 %v110
    %v412 = vpop.f32.mrb[0].mxu0
    %v413 = vadd.f32 0.0, %v412
    %v414 = vpop.f32.mrb[0].mxu0
    %v415 = vadd.f32 0.0, %v414
    %416 = vdwg.mxu0
    %417 = vmatprep.subr.mxu0 0.0
    %418 = vmatpush1.xpose.msra.mxu0 %v209
    %419 = vmatprep.subr.mxu0 0.0
    %420 = vmatpush1.xpose.msra.mxu0 %v212
    %421 = vmatprep.subr.mxu0 0.0
    %422 = vmatpush1.xpose.msra.mxu0 %v215
    %423 = vmatprep.subr.mxu0 0.0
    %424 = vmatpush1.xpose.msra.mxu0 %v218
    %425 = vmatprep.subr.mxu0 0.0
    %426 = vmatpush1.xpose.msra.mxu0 %v221
    %427 = vmatprep.subr.mxu0 0.0
    %428 = vmatpush1.xpose.msra.mxu0 %v224
    %429 = vmatprep.subr.mxu0 0.0
    %430 = vmatpush1.xpose.msra.mxu0 %v227
    %431 = vmatprep.subr.mxu0 0.0
    %432 = vmatpush1.xpose.msra.mxu0 %v230
    %433 = vmatprep.subr.mxu0 0.0
    %434 = vmatpush1.xpose.msra.mxu0 %v233
    %435 = vmatprep.subr.mxu0 0.0
    %436 = vmatpush1.xpose.msra.mxu0 %v236
    %437 = vmatprep.subr.mxu0 0.0
    %438 = vmatpush1.xpose.msra.mxu0 %v239
    %439 = vmatprep.subr.mxu0 0.0
    %440 = vmatpush1.xpose.msra.mxu0 %v242
    %441 = vmatprep.subr.mxu0 0.0
    %442 = vmatpush1.xpose.msra.mxu0 %v245
    %443 = vmatprep.subr.mxu0 0.0
    %444 = vmatpush1.xpose.msra.mxu0 %v248
    %445 = vmatprep.subr.mxu0 0.0
    %446 = vmatpush1.xpose.msra.mxu0 %v251
    %447 = vmatprep.subr.mxu0 0.0
    %448 = vmatpush1.xpose.msra.mxu0 %v254
    %449 = vmatprep.subr.mxu0 0.0
    %450 = vmatpush1.xpose.msra.mxu0 %v257
    %451 = vmatprep.subr.mxu0 0.0
    %452 = vmatpush1.xpose.msra.mxu0 %v260
    %453 = vmatprep.subr.mxu0 0.0
    %454 = vmatpush1.xpose.msra.mxu0 %v263
    %455 = vmatprep.subr.mxu0 0.0
    %456 = vmatpush1.xpose.msra.mxu0 %v266
    %457 = vmatprep.subr.mxu0 0.0
    %458 = vmatpush1.xpose.msra.mxu0 %v269
    %459 = vmatprep.subr.mxu0 0.0
    %460 = vmatpush1.xpose.msra.mxu0 %v272
    %461 = vmatprep.subr.mxu0 0.0
    %462 = vmatpush1.xpose.msra.mxu0 %v275
    %463 = vmatprep.subr.mxu0 0.0
    %464 = vmatpush1.xpose.msra.mxu0 %v278
    %465 = vmatprep.subr.mxu0 0.0
    %466 = vmatpush1.xpose.msra.mxu0 %v281
    %467 = vmatprep.subr.mxu0 0.0
    %468 = vmatpush1.xpose.msra.mxu0 %v284
    %469 = vmatprep.subr.mxu0 0.0
    %470 = vmatpush1.xpose.msra.mxu0 %v287
    %471 = vmatprep.subr.mxu0 0.0
    %472 = vmatpush1.xpose.msra.mxu0 %v290
    %473 = vmatprep.subr.mxu0 0.0
    %474 = vmatpush1.xpose.msra.mxu0 %v293
    %475 = vmatprep.subr.mxu0 0.0
    %476 = vmatpush1.xpose.msra.mxu0 %v296
    %477 = vmatprep.subr.mxu0 0.0
    %478 = vmatpush1.xpose.msra.mxu0 %v299
    %479 = vmatprep.subr.mxu0 0.0
    %480 = vmatpush1.xpose.msra.mxu0 %v302
    %481 = vmatprep.mubr.f32.mxu0 0.0
    %482 = vmatmul.mubr.f32.gmra.mrb[0].mxu0 %v89
    %v483 = vpop.f32.mrb[0].mxu0
    %v484 = vadd.f32 0.0, %v483
    %v485 = vpop.f32.mrb[0].mxu0
    %v486 = vadd.f32 0.0, %v485
    %487 = vmatprep.mubr.f32.mxu0 0.0
    %488 = vmatmul.mubr.f32.gmra.mrb[0].mxu0 %v92
    %v489 = vpop.f32.mrb[0].mxu0
    %v490 = vadd.f32 0.0, %v489
    %v491 = vpop.f32.mrb[0].mxu0
    %v492 = vadd.f32 0.0, %v491
    %493 = vmatprep.mubr.f32.mxu0 0.0
    %494 = vmatmul.mubr.f32.gmra.mrb[0].mxu0 %v95
    %v495 = vpop.f32.mrb[0].mxu0
    %v496 = vadd.f32 0.0, %v495
    %v497 = vpop.f32.mrb[0].mxu0
    %v498 = vadd.f32 0.0, %v497
    %499 = vmatprep.mubr.f32.mxu0 0.0
    %500 = vmatmul.mubr.f32.gmra.mrb[0].mxu0 %v98
    %v501 = vpop.f32.mrb[0].mxu0
    %v502 = vadd.f32 0.0, %v501
    %v503 = vpop.f32.mrb[0].mxu0
    %v504 = vadd.f32 0.0, %v503
    %505 = vmatprep.mubr.f32.mxu0 0.0
    %506 = vmatmul.mubr.f32.gmra.mrb[0].mxu0 %v101
    %v507 = vpop.f32.mrb[0].mxu0
    %v508 = vadd.f32 0.0, %v507
    %v509 = vpop.f32.mrb[0].mxu0
    %v510 = vadd.f32 0.0, %v509
    %511 = vmatprep.mubr.f32.mxu0 0.0
    %512 = vmatmul.mubr.f32.gmra.mrb[0].mxu0 %v104
    %v513 = vpop.f32.mrb[0].mxu0
    %v514 = vadd.f32 0.0, %v513
    %v515 = vpop.f32.mrb[0].mxu0
    %v516 = vadd.f32 0.0, %v515
    %517 = vmatprep.mubr.f32.mxu0 0.0
    %518 = vmatmul.mubr.f32.gmra.mrb[0].mxu0 %v107
    %v519 = vpop.f32.mrb[0].mxu0
    %v520 = vadd.f32 0.0, %v519
    %v521 = vpop.f32.mrb[0].mxu0
    %v522 = vadd.f32 0.0, %v521
    %523 = vmatprep.mubr.f32.mxu0 0.0
    %524 = vmatmul.mubr.f32.gmra.mrb[0].mxu0 %v110
    %v525 = vpop.f32.mrb[0].mxu0
    %v526 = vadd.f32 0.0, %v525
    %v527 = vpop.f32.mrb[0].mxu0
    %v528 = vadd.f32 0.0, %v527
    %529 = vdwg.mxu0
    %v530 = vadd.f32 %v371, %v377
    %v531 = vadd.f32 %v530, %v383
    %v532 = vadd.f32 %v531, %v389
    %v533 = vadd.f32 %v532, %v395
    %v534 = vadd.f32 %v533, %v401
    %v535 = vadd.f32 %v534, %v407
    %v536 = vadd.f32 %v535, %v413
    %v537 = vrot.slane %v536, 4
    %v538 = vadd.f32 %v536, %v537
    %v539 = vrot.slane %v538, 2
    %v540 = vadd.f32 %v538, %v539
    %v541 = vrot.slane %v540, 1
    %v542 = vadd.f32 %v540, %v541
    %v543 = vadd.f32 %v373, %v379
    %v544 = vadd.f32 %v543, %v385
    %v545 = vadd.f32 %v544, %v391
    %v546 = vadd.f32 %v545, %v397
    %v547 = vadd.f32 %v546, %v403
    %v548 = vadd.f32 %v547, %v409
    %v549 = vadd.f32 %v548, %v415
    %v550 = vrot.slane %v549, 4
    %v551 = vadd.f32 %v549, %v550
    %v552 = vrot.slane %v551, 2
    %v553 = vadd.f32 %v551, %v552
    %v554 = vrot.slane %v553, 1
    %v555 = vadd.f32 %v553, %v554
    %v556 = vadd.f32 %v484, %v490
    %v557 = vadd.f32 %v556, %v496
    %v558 = vadd.f32 %v557, %v502
    %v559 = vadd.f32 %v558, %v508
    %v560 = vadd.f32 %v559, %v514
    %v561 = vadd.f32 %v560, %v520
    %v562 = vadd.f32 %v561, %v526
    %v563 = vrot.slane %v562, 4
    %v564 = vadd.f32 %v562, %v563
    %v565 = vrot.slane %v564, 2
    %v566 = vadd.f32 %v564, %v565
    %v567 = vrot.slane %v566, 1
    %v568 = vadd.f32 %v566, %v567
    %v569 = vadd.f32 %v486, %v492
    %v570 = vadd.f32 %v569, %v498
    %v571 = vadd.f32 %v570, %v504
    %v572 = vadd.f32 %v571, %v510
    %v573 = vadd.f32 %v572, %v516
    %v574 = vadd.f32 %v573, %v522
    %v575 = vadd.f32 %v574, %v528
    %v576 = vrot.slane %v575, 4
    %v577 = vadd.f32 %v575, %v576
    %v578 = vrot.slane %v577, 2
    %v579 = vadd.f32 %v577, %v578
    %v580 = vrot.slane %v579, 1
    %v581 = vadd.f32 %v579, %v580
    %v582 = vmul.f32 %v371, %v371
    %v583 = vmul.f32 %v373, %v373
    %v584 = vmul.f32 %v484, %v484
    %v585 = vmul.f32 %v486, %v486
    %v586 = vmul.f32 %v377, %v377
    %v587 = vmul.f32 %v379, %v379
    %v588 = vmul.f32 %v490, %v490
    %v589 = vmul.f32 %v492, %v492
    %v590 = vmul.f32 %v383, %v383
    %v591 = vmul.f32 %v385, %v385
    %v592 = vmul.f32 %v496, %v496
    %v593 = vmul.f32 %v498, %v498
    %v594 = vmul.f32 %v389, %v389
    %v595 = vmul.f32 %v391, %v391
    %v596 = vmul.f32 %v502, %v502
    %v597 = vmul.f32 %v504, %v504
    %v598 = vmul.f32 %v395, %v395
    %v599 = vmul.f32 %v397, %v397
    %v600 = vmul.f32 %v508, %v508
    %v601 = vmul.f32 %v510, %v510
    %v602 = vmul.f32 %v401, %v401
    %v603 = vmul.f32 %v403, %v403
    %v604 = vmul.f32 %v514, %v514
    %v605 = vmul.f32 %v516, %v516
    %v606 = vmul.f32 %v407, %v407
    %v607 = vmul.f32 %v409, %v409
    %v608 = vmul.f32 %v520, %v520
    %v609 = vmul.f32 %v522, %v522
    %v610 = vmul.f32 %v413, %v413
    %v611 = vmul.f32 %v415, %v415
    %v612 = vmul.f32 %v526, %v526
    %v613 = vmul.f32 %v528, %v528
    %v614 = vadd.f32 %v582, %v586
    %v615 = vadd.f32 %v614, %v590
    %v616 = vadd.f32 %v615, %v594
    %v617 = vadd.f32 %v616, %v598
    %v618 = vadd.f32 %v617, %v602
    %v619 = vadd.f32 %v618, %v606
    %v620 = vadd.f32 %v619, %v610
    %v621 = vrot.slane %v620, 4
    %v622 = vadd.f32 %v620, %v621
    %v623 = vrot.slane %v622, 2
    %v624 = vadd.f32 %v622, %v623
    %v625 = vrot.slane %v624, 1
    %v626 = vadd.f32 %v624, %v625
    %v627 = vadd.f32 %v583, %v587
    %v628 = vadd.f32 %v627, %v591
    %v629 = vadd.f32 %v628, %v595
    %v630 = vadd.f32 %v629, %v599
    %v631 = vadd.f32 %v630, %v603
    %v632 = vadd.f32 %v631, %v607
    %v633 = vadd.f32 %v632, %v611
    %v634 = vrot.slane %v633, 4
    %v635 = vadd.f32 %v633, %v634
    %v636 = vrot.slane %v635, 2
    %v637 = vadd.f32 %v635, %v636
    %v638 = vrot.slane %v637, 1
    %v639 = vadd.f32 %v637, %v638
    %v640 = vadd.f32 %v584, %v588
    %v641 = vadd.f32 %v640, %v592
    %v642 = vadd.f32 %v641, %v596
    %v643 = vadd.f32 %v642, %v600
    %v644 = vadd.f32 %v643, %v604
    %v645 = vadd.f32 %v644, %v608
    %v646 = vadd.f32 %v645, %v612
    %v647 = vrot.slane %v646, 4
    %v648 = vadd.f32 %v646, %v647
    %v649 = vrot.slane %v648, 2
    %v650 = vadd.f32 %v648, %v649
    %v651 = vrot.slane %v650, 1
    %v652 = vadd.f32 %v650, %v651
    %v653 = vadd.f32 %v585, %v589
    %v654 = vadd.f32 %v653, %v593
    %v655 = vadd.f32 %v654, %v597
    %v656 = vadd.f32 %v655, %v601
    %v657 = vadd.f32 %v656, %v605
    %v658 = vadd.f32 %v657, %v609
    %v659 = vadd.f32 %v658, %v613
    %v660 = vrot.slane %v659, 4
    %v661 = vadd.f32 %v659, %v660
    %v662 = vrot.slane %v661, 2
    %v663 = vadd.f32 %v661, %v662
    %v664 = vrot.slane %v663, 1
    %v665 = vadd.f32 %v663, %v664
    %v666 = vmul.f32 %v542, 0.015625
    %v667 = vmul.f32 %v555, 0.015625
    %v668 = vmul.f32 %v568, 0.015625
    %v669 = vmul.f32 %v581, 0.015625
    %v670 = vmul.f32 %v626, 0.015625
    %v671 = vmul.f32 %v639, 0.015625
    %v672 = vmul.f32 %v652, 0.015625
    %v673 = vmul.f32 %v665, 0.015625
    %v674 = vmul.f32 %v666, %v666
    %v675 = vmul.f32 %v667, %v667
    %v676 = vmul.f32 %v668, %v668
    %v677 = vmul.f32 %v669, %v669
    %v678 = vsub.f32 %v670, %v674
    %v679 = vsub.f32 %v671, %v675
    %v680 = vsub.f32 %v672, %v676
    %v681 = vsub.f32 %v673, %v677
    %v682 = vld [vmem:[%s2] ss:$2 sm:$0xf]
    %s683 = scalar_lea.vmem %s2, 1
    %v684 = vld [vmem:[%s683] ss:$2 sm:$0xf]
    %v685 = vadd.f32 %v678, 1e-05
    %v686 = vadd.f32 %v679, 1e-05
    %v687 = vadd.f32 %v680, 1e-05
    %v688 = vadd.f32 %v681, 1e-05
    %v689 = vrsqrt.pop %v685
    %v690 = vrsqrt.pop %v686
    %v691 = vrsqrt.pop %v687
    %v692 = vrsqrt.pop %v688
    %v697 = vcombine.low %v689, %v690
    %v698 = vcombine.low %v691, %v692
    %v700 = vunpack.c.l.s4 1966171168
    %v701 = vunpack.c.0.s8 %v700
    %v702 = vlaneseq
    %v703 = vshrl.u32 %v702, 7
    %v704 = vsub.s32 %v701, %v703
    %v705 = vrot.slane %v697, %v704
    %v707 = vunpack.c.l.s4 1966171168
    %v708 = vunpack.c.0.s8 %v707
    %v709 = vlaneseq
    %v710 = vshrl.u32 %v709, 7
    %v711 = vsub.s32 %v708, %v710
    %v712 = vrot.slane %v698, %v711
    %v713 = vcombine.low %v705, %v712
    %v715 = vunpack.c.l.s4 1966171168
    %v716 = vunpack.c.0.s8 %v715
    %v717 = vlaneseq
    %v718 = vshrl.u32 %v717, 7
    %v719 = vsub.s32 %v716, %v718
    %v720 = vrot.slane %v713, %v719
    %v722 = vmul.f32 %v682, %v720
    %v724 = vlaneseq
    %v725 = vshrl.u32 %v724, 7
    %v726 = vsub.s32 0, %v725
    %v727 = vrot.slane %v722, %v726
    %v728 = vlaneseq
    %v729 = vshrl.u32 %v728, 7
    %v730 = vsub.s32 1, %v729
    %v731 = vrot.slane %v722, %v730
    %v732 = vlaneseq
    %v733 = vshrl.u32 %v732, 7
    %v734 = vsub.s32 2, %v733
    %v735 = vrot.slane %v722, %v734
    %v736 = vlaneseq
    %v737 = vshrl.u32 %v736, 7
    %v738 = vsub.s32 3, %v737
    %v739 = vrot.slane %v722, %v738
    %v744 = vmul.f32 %v666, %v727
    %v745 = vmul.f32 %v667, %v731
    %v746 = vmul.f32 %v668, %v735
    %v747 = vmul.f32 %v669, %v739
    %v752 = vcombine.low %v744, %v745
    %v753 = vcombine.low %v746, %v747
    %v755 = vunpack.c.l.s4 1966171168
    %v756 = vunpack.c.0.s8 %v755
    %v757 = vlaneseq
    %v758 = vshrl.u32 %v757, 7
    %v759 = vsub.s32 %v756, %v758
    %v760 = vrot.slane %v752, %v759
    %v762 = vunpack.c.l.s4 1966171168
    %v763 = vunpack.c.0.s8 %v762
    %v764 = vlaneseq
    %v765 = vshrl.u32 %v764, 7
    %v766 = vsub.s32 %v763, %v765
    %v767 = vrot.slane %v753, %v766
    %v768 = vcombine.low %v760, %v767
    %v770 = vunpack.c.l.s4 1966171168
    %v771 = vunpack.c.0.s8 %v770
    %v772 = vlaneseq
    %v773 = vshrl.u32 %v772, 7
    %v774 = vsub.s32 %v771, %v773
    %v775 = vrot.slane %v768, %v774
    %v777 = vsub.f32 %v684, %v775
    %v778 = vmul.f32 %v371, %v727
    %v779 = vmul.f32 %v373, %v731
    %v780 = vmul.f32 %v484, %v735
    %v781 = vmul.f32 %v486, %v739
    %v782 = vmul.f32 %v377, %v727
    %v783 = vmul.f32 %v379, %v731
    %v784 = vmul.f32 %v490, %v735
    %v785 = vmul.f32 %v492, %v739
    %v786 = vmul.f32 %v383, %v727
    %v787 = vmul.f32 %v385, %v731
    %v788 = vmul.f32 %v496, %v735
    %v789 = vmul.f32 %v498, %v739
    %v790 = vmul.f32 %v389, %v727
    %v791 = vmul.f32 %v391, %v731
    %v792 = vmul.f32 %v502, %v735
    %v793 = vmul.f32 %v504, %v739
    %v794 = vmul.f32 %v395, %v727
    %v795 = vmul.f32 %v397, %v731
    %v796 = vmul.f32 %v508, %v735
    %v797 = vmul.f32 %v510, %v739
    %v798 = vmul.f32 %v401, %v727
    %v799 = vmul.f32 %v403, %v731
    %v800 = vmul.f32 %v514, %v735
    %v801 = vmul.f32 %v516, %v739
    %v802 = vmul.f32 %v407, %v727
    %v803 = vmul.f32 %v409, %v731
    %v804 = vmul.f32 %v520, %v735
    %v805 = vmul.f32 %v522, %v739
    %v806 = vmul.f32 %v413, %v727
    %v807 = vmul.f32 %v415, %v731
    %v808 = vmul.f32 %v526, %v735
    %v809 = vmul.f32 %v528, %v739
    %v811 = vlaneseq
    %v812 = vshrl.u32 %v811, 7
    %v813 = vsub.s32 0, %v812
    %v814 = vrot.slane %v777, %v813
    %v815 = vlaneseq
    %v816 = vshrl.u32 %v815, 7
    %v817 = vsub.s32 1, %v816
    %v818 = vrot.slane %v777, %v817
    %v819 = vlaneseq
    %v820 = vshrl.u32 %v819, 7
    %v821 = vsub.s32 2, %v820
    %v822 = vrot.slane %v777, %v821
    %v823 = vlaneseq
    %v824 = vshrl.u32 %v823, 7
    %v825 = vsub.s32 3, %v824
    %v826 = vrot.slane %v777, %v825
    %v831 = vadd.f32 %v778, %v814
    %v832 = vadd.f32 %v779, %v818
    %v833 = vadd.f32 %v780, %v822
    %v834 = vadd.f32 %v781, %v826
    %v835 = vadd.f32 %v782, %v814
    %v836 = vadd.f32 %v783, %v818
    %v837 = vadd.f32 %v784, %v822
    %v838 = vadd.f32 %v785, %v826
    %v839 = vadd.f32 %v786, %v814
    %v840 = vadd.f32 %v787, %v818
    %v841 = vadd.f32 %v788, %v822
    %v842 = vadd.f32 %v789, %v826
    %v843 = vadd.f32 %v790, %v814
    %v844 = vadd.f32 %v791, %v818
    %v845 = vadd.f32 %v792, %v822
    %v846 = vadd.f32 %v793, %v826
    %v847 = vadd.f32 %v794, %v814
    %v848 = vadd.f32 %v795, %v818
    %v849 = vadd.f32 %v796, %v822
    %v850 = vadd.f32 %v797, %v826
    %v851 = vadd.f32 %v798, %v814
    %v852 = vadd.f32 %v799, %v818
    %v853 = vadd.f32 %v800, %v822
    %v854 = vadd.f32 %v801, %v826
    %v855 = vadd.f32 %v802, %v814
    %v856 = vadd.f32 %v803, %v818
    %v857 = vadd.f32 %v804, %v822
    %v858 = vadd.f32 %v805, %v826
    %v859 = vadd.f32 %v806, %v814
    %v860 = vadd.f32 %v807, %v818
    %v861 = vadd.f32 %v808, %v822
    %v862 = vadd.f32 %v809, %v826
    %863 = vst [vmem:[#allocation2] sm:$0xff] %v831
    %864 = vst [vmem:[#allocation2 + $0x8] sm:$0xff] %v832
    %865 = vst [vmem:[#allocation2 + $0x10] sm:$0xff] %v833
    %866 = vst [vmem:[#allocation2 + $0x18] sm:$0xff] %v834
    %867 = vst [vmem:[#allocation2 + $0x20] sm:$0xff] %v835
    %868 = vst [vmem:[#allocation2 + $0x28] sm:$0xff] %v836
    %869 = vst [vmem:[#allocation2 + $0x30] sm:$0xff] %v837
    %870 = vst [vmem:[#allocation2 + $0x38] sm:$0xff] %v838
    %871 = vst [vmem:[#allocation2 + $0x40] sm:$0xff] %v839
    %872 = vst [vmem:[#allocation2 + $0x48] sm:$0xff] %v840
    %873 = vst [vmem:[#allocation2 + $0x50] sm:$0xff] %v841
    %874 = vst [vmem:[#allocation2 + $0x58] sm:$0xff] %v842
    %875 = vst [vmem:[#allocation2 + $0x60] sm:$0xff] %v843
    %876 = vst [vmem:[#allocation2 + $0x68] sm:$0xff] %v844
    %877 = vst [vmem:[#allocation2 + $0x70] sm:$0xff] %v845
    %878 = vst [vmem:[#allocation2 + $0x78] sm:$0xff] %v846
    %879 = vst [vmem:[#allocation2 + $0x80] sm:$0xff] %v847
    %880 = vst [vmem:[#allocation2 + $0x88] sm:$0xff] %v848
    %881 = vst [vmem:[#allocation2 + $0x90] sm:$0xff] %v849
    %882 = vst [vmem:[#allocation2 + $0x98] sm:$0xff] %v850
    %883 = vst [vmem:[#allocation2 + $0xa0] sm:$0xff] %v851
    %884 = vst [vmem:[#allocation2 + $0xa8] sm:$0xff] %v852
    %885 = vst [vmem:[#allocation2 + $0xb0] sm:$0xff] %v853
    %886 = vst [vmem:[#allocation2 + $0xb8] sm:$0xff] %v854
    %887 = vst [vmem:[#allocation2 + $0xc0] sm:$0xff] %v855
    %888 = vst [vmem:[#allocation2 + $0xc8] sm:$0xff] %v856
    %889 = vst [vmem:[#allocation2 + $0xd0] sm:$0xff] %v857
    %890 = vst [vmem:[#allocation2 + $0xd8] sm:$0xff] %v858
    %891 = vst [vmem:[#allocation2 + $0xe0] sm:$0xff] %v859
    %892 = vst [vmem:[#allocation2 + $0xe8] sm:$0xff] %v860
    %893 = vst [vmem:[#allocation2 + $0xf0] sm:$0xff] %v861
    %894 = vst [vmem:[#allocation2 + $0xf8] sm:$0xff] %v862
    // Predicated region
    $region14: #{tpu_custom_call.1} parent=1 // pred_check
      _
    $region15: #{tpu_custom_call.1} parent=1 // pred_check_branch
      %896 = sbr.rel (0) target = $region17
    $region16: #{tpu_custom_call.1} parent=1 // pred_region
      %s898 = ssub.s32 4096, 4096
      %899 = vsyncadd [#allocation3], %s898
      %s900 = sshll.u32 [#allocation2], 4
      %s901 = int_to_ptr.vmem [resolvable:$true] %s900
      %906 = dma.vmem_to_hbm [thread:$0]  %s901, 4096, %s3, [#allocation3], 512, 512, 32
    $region17: #{tpu_custom_call.1} parent=1 // pred_fallthru
      _
    // Predicated region
    $region18: #{tpu_custom_call.1} parent=1 // pred_check
      _
    $region19: #{tpu_custom_call.1} parent=1 // pred_check_branch
      %908 = sbr.rel (0) target = $region21
    $region20: #{tpu_custom_call.1} parent=1 // pred_region
      %909 = dma.done [#allocation3], 4096
    $region21: #{tpu_custom_call.1} parent=1 // pred_fallthru
      _
    %910 = vsyncpa [#allocation3], 1

</llo_original>
